<compile_context>
chip_gen: v7x
topology: tpu7x:2x2x1
jax: 0.10.0
libtpu: 0.0.40
codegen_flags: <defaults>
</compile_context>

<pallas_src>
import functools
import math

import jax
import jax.numpy as jnp
from jax.experimental import pallas as pl
from jax.experimental.pallas import tpu as pltpu


_PAD_MASK = 1e9   # mask value for padded bank columns / padded rows -> exp() == 0


def _round_up(x, m):
    return ((x + m - 1) // m) * m


def _coke_kernel(*refs, inv_T, has_noise):
    """Single-invocation body: every (batch, keypoint) row is one matmul row."""
    if has_noise:
        (kpfeat_ref, noisefeat_ref, bank_ref, maskd_ref, idx_ref, wvis_ref,
         colsum_ref, hsn_ref, out_ref) = refs
    else:
        kpfeat_ref, bank_ref, maskd_ref, idx_ref, wvis_ref, out_ref = refs

    # ---- contrastive branch --------------------------------------------------
    kp = kpfeat_ref[...]                                       # (NKp, Cp)
    ssq = jnp.sum(kp * kp, axis=-1, keepdims=True)
    kp = kp * jax.lax.rsqrt(jnp.maximum(ssq, 1e-24))           # F.normalize(p=2)

    # one tall-skinny MXU matmul for the whole batch
    logits = jnp.dot(kp, bank_ref[...], preferred_element_type=jnp.float32)
    logits = logits * inv_T - maskd_ref[...]                   # (NKp, Bkp)

    m = jnp.max(logits, axis=-1, keepdims=True)
    lse = jnp.log(jnp.sum(jnp.exp(logits - m), axis=-1, keepdims=True)) + m
    lane = jax.lax.broadcasted_iota(jnp.int32, logits.shape, 1)
    tgt = jnp.sum(jnp.where(lane == idx_ref[...], logits, 0.0),
                  axis=-1, keepdims=True)
    ce = lse - tgt                                             # (NKp, 1)

    w = wvis_ref[...]                                          # (NKp, 1)
    ce_sum = jnp.sum(ce * w)
    w_sum = jnp.sum(w)

    # ---- noise regularization -------------------------------------------------
    # sum(noise_norm @ B_fg) == sum_c (sum_rows noise_norm)[c] * (sum_cols B_fg)[c]
    if has_noise:
        nf = noisefeat_ref[...]                                # (NNp, Cp)
        nssq = jnp.sum(nf * nf, axis=-1, keepdims=True)
        nf = nf * jax.lax.rsqrt(jnp.maximum(nssq, 1e-24))
        noise_sum = jnp.sum(nf * colsum_ref[...] * hsn_ref[...])
    else:
        noise_sum = jnp.float32(0.0)

    # ---- single lane-dense output block ---------------------------------------
    lane_o = jax.lax.broadcasted_iota(jnp.int32, out_ref.shape, 1)
    out_ref[...] = (jnp.where(lane_o == 0, ce_sum, 0.0) +
                    jnp.where(lane_o == 1, w_sum, 0.0) +
                    jnp.where(lane_o == 2, noise_sum, 0.0))


def coke_loss_pallas(coke_features, keypoint_positions, has_smpl, iskpvisible,
                     feature_bank, adj_mat, vert_orients, bg_mask, noise_key,
                     *, n_noise_points, num_neg, n_orient, T, weight_noise,
                     loss_contrastive_weight=1.0, loss_noise_reg_weight=1.0):
    N, C, H, W = coke_features.shape
    K = keypoint_positions.shape[1]
    HW = H * W
    Bk_fg = K * n_orient
    Bk = Bk_fg + num_neg
    has_noise = n_noise_points > 0

    # ---- remove_outside ----
    kp = keypoint_positions
    r, c = kp[..., 0], kp[..., 1]
    invisible = (r < 0) | (c < 0) | (r > H - 1) | (c > W - 1)
    vis = jnp.logical_and(iskpvisible, jnp.logical_not(invisible))
    kp = jnp.where(invisible[..., None], 0, kp)
    # iskpvisible[has_smpl == 0] = 0
    vis = jnp.where((has_smpl == 0)[:, None], False, vis)

    # ---- orientation-aware target index ----
    index = jnp.arange(K, dtype=jnp.int32)[None, :] * jnp.ones((N, 1), jnp.int32)
    if n_orient > 1:
        index = index + vert_orients.astype(jnp.int32) * K          # (N, K)

    # ---- GlobalLocalConverter(local_size=1): pad=0, unfold(k=1) == flatten ----
    X_t = jnp.transpose(coke_features.reshape(N, C, HW), (0, 2, 1))  # (N, HW, C)

    # ---- keypoints_to_pixel_index (downsample_rate=1, line_size=W) ----
    kp_idx = kp[..., 0] * W + kp[..., 1]                             # (N, K)

    # ---- gather raw keypoint features (L2 normalization happens in-kernel) ----
    kp_feats = jnp.take_along_axis(X_t, kp_idx[:, :, None], axis=1)  # (N, K, C)

    # ---- lane-dense padded layouts ----
    NK = N * K
    NKp = _round_up(NK, 8)
    Cp = _round_up(C, 128)
    Bkp = _round_up(Bk, 128)

    kp_pad = jnp.pad(kp_feats.reshape(NK, C).astype(jnp.float32),
                     ((0, NKp - NK), (0, Cp - C)))

    bank_t = jnp.transpose(feature_bank).astype(jnp.float32)         # (C, Bk)
    bank_pad = jnp.pad(bank_t, ((0, Cp - C), (0, Bkp - Bk)))          # zero cols

    # ---- mask_remove_adjacent (batch-flattened, pad cols get a huge mask) ----
    eye = jnp.eye(K, dtype=jnp.float32)
    tem = adj_mat.astype(jnp.float32) * (1.0 - eye)[None]
    maskd = jnp.concatenate(
        [jnp.tile(tem, (1, 1, n_orient)) * 1e5,
         -jnp.ones((N, K, num_neg), jnp.float32) * math.log(weight_noise)],
        axis=2).reshape(NK, Bk)
    maskd_pad = jnp.pad(maskd, ((0, NKp - NK), (0, Bkp - Bk)),
                        constant_values=_PAD_MASK)

    idx_pad = jnp.pad(index.reshape(NK, 1), ((0, NKp - NK), (0, 0)))
    wvis_pad = jnp.pad(vis.astype(jnp.float32).reshape(NK, 1),
                       ((0, NKp - NK), (0, 0)))

    in_arrays = [kp_pad]

    if has_noise:
        # ---- get_noise_pixel_index (noise_on_mask=True) ----
        # TODO(synk): torch.multinomial RNG replaced by Gumbel top-k sampling
        # (same without-replacement distribution, different random stream).
        smask = jnp.ones((N, HW), jnp.float32)
        smask = smask.at[jnp.arange(N)[:, None], kp_idx].set(0.0)
        smask = smask * bg_mask.reshape(N, HW).astype(jnp.float32)
        smask = jnp.where((smask.sum(axis=1) < 1e-6)[:, None], 1.0, smask)
        u = jax.random.uniform(noise_key, (N, HW), minval=1e-20, maxval=1.0)
        gumbel = -jnp.log(-jnp.log(u))
        logw = jnp.where(smask > 0, jnp.log(jnp.maximum(smask, 1e-20)), -jnp.inf)
        _, noise_idx = jax.lax.top_k(logw + gumbel, n_noise_points)   # (N, Nn)

        noise_feats = jnp.take_along_axis(X_t, noise_idx.astype(jnp.int32)[:, :, None],
                                          axis=1)                     # (N, Nn, C)
        NN = N * n_noise_points
        NNp = _round_up(NN, 8)
        noise_pad = jnp.pad(noise_feats.reshape(NN, C).astype(jnp.float32),
                            ((0, NNp - NN), (0, Cp - C)))

        colsum = jnp.sum(bank_t[:, :Bk_fg], axis=1)                   # (C,)
        colsum_pad = jnp.pad(colsum.reshape(1, C), ((0, 0), (0, Cp - C)))

        hsn = jnp.repeat(has_smpl.astype(jnp.float32), n_noise_points).reshape(NN, 1)
        hsn_pad = jnp.pad(hsn, ((0, NNp - NN), (0, 0)))

        in_arrays.append(noise_pad)

    in_arrays += [bank_pad, maskd_pad, idx_pad, wvis_pad]
    if has_noise:
        in_arrays += [colsum_pad, hsn_pad]

    def _spec(shape):
        return pl.BlockSpec(shape, lambda i: (0, 0))

    in_specs = [_spec((NKp, Cp))]
    if has_noise:
        in_specs.append(_spec((NNp, Cp)))
    in_specs += [_spec((Cp, Bkp)), _spec((NKp, Bkp)), _spec((NKp, 1)), _spec((NKp, 1))]
    if has_noise:
        in_specs += [_spec((1, Cp)), _spec((NNp, 1))]

    kernel = functools.partial(_coke_kernel, inv_T=1.0 / T, has_noise=has_noise)

    out = pl.pallas_call(
        kernel,
        out_shape=jax.ShapeDtypeStruct((1, 128), jnp.float32),
        grid_spec=pltpu.PrefetchScalarGridSpec(
            num_scalar_prefetch=0,
            grid=(1,),
            in_specs=in_specs,
            out_specs=_spec((1, 128)),
        ),
        compiler_params=pltpu.CompilerParams(dimension_semantics=("arbitrary",)),
    )(*in_arrays)

    ce_sum = out[0, 0]
    w_sum = out[0, 1]
    noise_sum = out[0, 2]

    # mean over (has_smpl & visible) rows; NaN (empty selection) -> 0, as in torch
    loss_contrastive = (ce_sum / w_sum) * loss_contrastive_weight
    loss_contrastive = jnp.where(jnp.isnan(loss_contrastive), 0.0, loss_contrastive)

    if has_noise:
        n_sel = jnp.sum(has_smpl.astype(jnp.float32))
        noise_cnt = n_sel * float(n_noise_points * Bk_fg)
        loss_noise_reg = (noise_sum / noise_cnt) * loss_noise_reg_weight
    else:
        loss_noise_reg = jnp.zeros((), jnp.float32)

    return {'loss_contrastive': loss_contrastive, 'loss_noise_reg': loss_noise_reg}


if __name__ == "__main__":
    key = jax.random.PRNGKey(0)
    k1, k2, k3, k4, k5, k6, k7 = jax.random.split(key, 7)

    # small shapes consistent with the module
    N, C, H, W = 2, 32, 16, 16
    K = 8                       # keypoints / mesh vertices
    n_noise_points = 8
    num_neg = 4
    n_orient = 3
    T = 0.07
    weight_noise = 0.005

    coke_features = jax.random.normal(k1, (N, C, H, W), jnp.float32)   # NCHW
    keypoint_positions = jax.random.randint(k2, (N, K, 2), -2, H + 2)  # (row, col), some OOB
    iskpvisible = jax.random.bernoulli(k3, 0.9, (N, K))
    has_smpl = jnp.array([1, 0], jnp.int32)
    vert_orients = jax.random.randint(k4, (N, K), 0, n_orient)
    bg_mask = (jax.random.uniform(k5, (N, H, W)) > 0.2).astype(jnp.float32)

    # deterministic synthetic feature bank (K*n_orient fg entries + num_neg negatives)
    Bk = K * n_orient + num_neg
    feature_bank = jax.random.normal(k6, (Bk, C), jnp.float32)
    feature_bank = feature_bank / jnp.linalg.norm(feature_bank, axis=1, keepdims=True)

    # deterministic ring-mesh adjacency matrix, broadcast over the batch
    ar = jnp.arange(K)
    ring = (((ar[:, None] - ar[None, :]) % K == 1) |
            ((ar[None, :] - ar[:, None]) % K == 1)).astype(jnp.float32)
    adj_mat = jnp.broadcast_to(ring, (N, K, K))

    losses = coke_loss_pallas(
        coke_features, keypoint_positions, has_smpl, iskpvisible,
        feature_bank, adj_mat, vert_orients, bg_mask, k7,
        n_noise_points=n_noise_points, num_neg=num_neg, n_orient=n_orient,
        T=T, weight_noise=weight_noise,
        loss_contrastive_weight=1.0, loss_noise_reg_weight=1.0)

    jax.block_until_ready(losses)
    print("KERNEL_OK")
</pallas_src>

<mosaic_0001>
module attributes {stable_mosaic.version = 11 : i64} {
  func.func @_coke_kernel(%arg0: i32, %arg1: memref<16x128xf32, #tpu.memory_space<vmem>>, %arg2: memref<16x128xf32, #tpu.memory_space<vmem>>, %arg3: memref<128x128xf32, #tpu.memory_space<vmem>>, %arg4: memref<16x128xf32, #tpu.memory_space<vmem>>, %arg5: memref<16x1xi32, #tpu.memory_space<vmem>>, %arg6: memref<16x1xf32, #tpu.memory_space<vmem>>, %arg7: memref<1x128xf32, #tpu.memory_space<vmem>>, %arg8: memref<16x1xf32, #tpu.memory_space<vmem>>, %arg9: memref<1x128xf32, #tpu.memory_space<vmem>>) attributes {dimension_semantics = [#tpu.dimension_semantics<arbitrary>], iteration_bounds = array<i64: 1>, scalar_prefetch = 0 : i64, scratch_operands = 0 : i64, tpu.core_type = #tpu.core_type<tc>, window_params = [{pipeline_mode = #tpu.pipeline_mode<synchronous>, transform_indices = @transform_0, window_bounds = array<i64: 16, 128>}, {pipeline_mode = #tpu.pipeline_mode<synchronous>, transform_indices = @transform_1, window_bounds = array<i64: 16, 128>}, {pipeline_mode = #tpu.pipeline_mode<synchronous>, transform_indices = @transform_2, window_bounds = array<i64: 128, 128>}, {pipeline_mode = #tpu.pipeline_mode<synchronous>, transform_indices = @transform_3, window_bounds = array<i64: 16, 128>}, {pipeline_mode = #tpu.pipeline_mode<synchronous>, transform_indices = @transform_4, window_bounds = array<i64: 16, 1>}, {pipeline_mode = #tpu.pipeline_mode<synchronous>, transform_indices = @transform_5, window_bounds = array<i64: 16, 1>}, {pipeline_mode = #tpu.pipeline_mode<synchronous>, transform_indices = @transform_6, window_bounds = array<i64: 1, 128>}, {pipeline_mode = #tpu.pipeline_mode<synchronous>, transform_indices = @transform_7, window_bounds = array<i64: 16, 1>}, {pipeline_mode = #tpu.pipeline_mode<synchronous>, transform_indices = @transform_8, window_bounds = array<i64: 1, 128>}]} {
    %c0 = arith.constant 0 : index
    %c0_0 = arith.constant 0 : index
    %0 = vector.load %arg1[%c0, %c0_0] : memref<16x128xf32, #tpu.memory_space<vmem>>, vector<16x128xf32>
    %1 = arith.mulf %0, %0 : vector<16x128xf32>
    %cst = arith.constant dense<0.000000e+00> : vector<16xf32>
    %2 = vector.multi_reduction <add>, %1, %cst [1] : vector<16x128xf32> to vector<16xf32>
    %3 = vector.shape_cast %2 : vector<16xf32> to vector<16x1xf32>
    %cst_1 = arith.constant 1.000000e-24 : f32
    %4 = vector.broadcast %cst_1 : f32 to vector<16x1xf32>
    %5 = arith.maximumf %3, %4 : vector<16x1xf32>
    %6 = math.rsqrt %5 : vector<16x1xf32>
    %7 = vector.broadcast %6 : vector<16x1xf32> to vector<16x128xf32>
    %8 = arith.mulf %0, %7 : vector<16x128xf32>
    %c0_2 = arith.constant 0 : index
    %c0_3 = arith.constant 0 : index
    %9 = vector.load %arg3[%c0_2, %c0_3] : memref<128x128xf32, #tpu.memory_space<vmem>>, vector<128x128xf32>
    %cst_4 = arith.constant dense<0.000000e+00> : vector<16x128xf32>
    %10 = tpu.matmul %8, %9, %cst_4 {dimension_numbers = #tpu.dot_dimension_numbers<[1], [0], [0], [1], [0, 0, 1, 1], [], []>} : vector<16x128xf32>, vector<128x128xf32>, vector<16x128xf32> -> vector<16x128xf32>
    %cst_5 = arith.constant 14.2857141 : f32
    %11 = vector.broadcast %cst_5 : f32 to vector<16x128xf32>
    %12 = arith.mulf %10, %11 : vector<16x128xf32>
    %c0_6 = arith.constant 0 : index
    %c0_7 = arith.constant 0 : index
    %13 = vector.load %arg4[%c0_6, %c0_7] : memref<16x128xf32, #tpu.memory_space<vmem>>, vector<16x128xf32>
    %14 = arith.subf %12, %13 : vector<16x128xf32>
    %cst_8 = arith.constant dense<0xFF800000> : vector<16xf32>
    %15 = vector.multi_reduction <maximumf>, %14, %cst_8 [1] : vector<16x128xf32> to vector<16xf32>
    %16 = vector.shape_cast %15 : vector<16xf32> to vector<16x1xf32>
    %17 = vector.broadcast %16 : vector<16x1xf32> to vector<16x128xf32>
    %18 = arith.subf %14, %17 : vector<16x128xf32>
    %19 = math.exp %18 : vector<16x128xf32>
    %cst_9 = arith.constant dense<0.000000e+00> : vector<16xf32>
    %20 = vector.multi_reduction <add>, %19, %cst_9 [1] : vector<16x128xf32> to vector<16xf32>
    %21 = vector.shape_cast %20 : vector<16xf32> to vector<16x1xf32>
    %22 = math.log %21 : vector<16x1xf32>
    %23 = arith.addf %22, %16 : vector<16x1xf32>
    %24 = tpu.iota {dimensions = array<i32: 1>} : vector<16x128xi32>
    %c0_10 = arith.constant 0 : index
    %c0_11 = arith.constant 0 : index
    %25 = vector.load %arg5[%c0_10, %c0_11] : memref<16x1xi32, #tpu.memory_space<vmem>>, vector<16x1xi32>
    %26 = vector.broadcast %25 : vector<16x1xi32> to vector<16x128xi32>
    %27 = arith.cmpi eq, %24, %26 : vector<16x128xi32>
    %cst_12 = arith.constant 0.000000e+00 : f32
    %28 = vector.broadcast %cst_12 : f32 to vector<16x128xf32>
    %29 = arith.select %27, %14, %28 : vector<16x128xi1>, vector<16x128xf32>
    %cst_13 = arith.constant dense<0.000000e+00> : vector<16xf32>
    %30 = vector.multi_reduction <add>, %29, %cst_13 [1] : vector<16x128xf32> to vector<16xf32>
    %31 = vector.shape_cast %30 : vector<16xf32> to vector<16x1xf32>
    %32 = arith.subf %23, %31 : vector<16x1xf32>
    %c0_14 = arith.constant 0 : index
    %c0_15 = arith.constant 0 : index
    %33 = vector.load %arg6[%c0_14, %c0_15] : memref<16x1xf32, #tpu.memory_space<vmem>>, vector<16x1xf32>
    %34 = arith.mulf %32, %33 : vector<16x1xf32>
    %35 = vector.shape_cast %34 : vector<16x1xf32> to vector<1x16x1xf32>
    %cst_16 = arith.constant dense<0.000000e+00> : vector<1xf32>
    %36 = vector.multi_reduction <add>, %35, %cst_16 [1, 2] : vector<1x16x1xf32> to vector<1xf32>
    %37 = vector.shape_cast %36 : vector<1xf32> to vector<1x1x1xf32>
    %38 = vector.extract %37[0, 0, 0] : f32 from vector<1x1x1xf32>
    %39 = vector.shape_cast %33 : vector<16x1xf32> to vector<1x16x1xf32>
    %cst_17 = arith.constant dense<0.000000e+00> : vector<1xf32>
    %40 = vector.multi_reduction <add>, %39, %cst_17 [1, 2] : vector<1x16x1xf32> to vector<1xf32>
    %41 = vector.shape_cast %40 : vector<1xf32> to vector<1x1x1xf32>
    %42 = vector.extract %41[0, 0, 0] : f32 from vector<1x1x1xf32>
    %c0_18 = arith.constant 0 : index
    %c0_19 = arith.constant 0 : index
    %43 = vector.load %arg2[%c0_18, %c0_19] : memref<16x128xf32, #tpu.memory_space<vmem>>, vector<16x128xf32>
    %44 = arith.mulf %43, %43 : vector<16x128xf32>
    %cst_20 = arith.constant dense<0.000000e+00> : vector<16xf32>
    %45 = vector.multi_reduction <add>, %44, %cst_20 [1] : vector<16x128xf32> to vector<16xf32>
    %46 = vector.shape_cast %45 : vector<16xf32> to vector<16x1xf32>
    %cst_21 = arith.constant 1.000000e-24 : f32
    %47 = vector.broadcast %cst_21 : f32 to vector<16x1xf32>
    %48 = arith.maximumf %46, %47 : vector<16x1xf32>
    %49 = math.rsqrt %48 : vector<16x1xf32>
    %50 = vector.broadcast %49 : vector<16x1xf32> to vector<16x128xf32>
    %51 = arith.mulf %43, %50 : vector<16x128xf32>
    %c0_22 = arith.constant 0 : index
    %c0_23 = arith.constant 0 : index
    %52 = vector.load %arg7[%c0_22, %c0_23] : memref<1x128xf32, #tpu.memory_space<vmem>>, vector<1x128xf32>
    %53 = vector.broadcast %52 : vector<1x128xf32> to vector<16x128xf32>
    %54 = arith.mulf %51, %53 : vector<16x128xf32>
    %c0_24 = arith.constant 0 : index
    %c0_25 = arith.constant 0 : index
    %55 = vector.load %arg8[%c0_24, %c0_25] : memref<16x1xf32, #tpu.memory_space<vmem>>, vector<16x1xf32>
    %56 = vector.broadcast %55 : vector<16x1xf32> to vector<16x128xf32>
    %57 = arith.mulf %54, %56 : vector<16x128xf32>
    %58 = vector.shape_cast %57 : vector<16x128xf32> to vector<1x16x128xf32>
    %cst_26 = arith.constant dense<0.000000e+00> : vector<1xf32>
    %59 = vector.multi_reduction <add>, %58, %cst_26 [1, 2] : vector<1x16x128xf32> to vector<1xf32>
    %60 = vector.shape_cast %59 : vector<1xf32> to vector<1x1x1xf32>
    %61 = vector.extract %60[0, 0, 0] : f32 from vector<1x1x1xf32>
    %62 = tpu.iota {dimensions = array<i32: 1>} : vector<1x128xi32>
    %c0_i32 = arith.constant 0 : i32
    %63 = vector.broadcast %c0_i32 : i32 to vector<1x128xi32>
    %64 = arith.cmpi eq, %62, %63 : vector<1x128xi32>
    %cst_27 = arith.constant 0.000000e+00 : f32
    %65 = vector.broadcast %38 : f32 to vector<1x128xf32>
    %66 = vector.broadcast %cst_27 : f32 to vector<1x128xf32>
    %67 = arith.select %64, %65, %66 : vector<1x128xi1>, vector<1x128xf32>
    %c1_i32 = arith.constant 1 : i32
    %68 = vector.broadcast %c1_i32 : i32 to vector<1x128xi32>
    %69 = arith.cmpi eq, %62, %68 : vector<1x128xi32>
    %cst_28 = arith.constant 0.000000e+00 : f32
    %70 = vector.broadcast %42 : f32 to vector<1x128xf32>
    %71 = vector.broadcast %cst_28 : f32 to vector<1x128xf32>
    %72 = arith.select %69, %70, %71 : vector<1x128xi1>, vector<1x128xf32>
    %73 = arith.addf %67, %72 : vector<1x128xf32>
    %c2_i32 = arith.constant 2 : i32
    %74 = vector.broadcast %c2_i32 : i32 to vector<1x128xi32>
    %75 = arith.cmpi eq, %62, %74 : vector<1x128xi32>
    %cst_29 = arith.constant 0.000000e+00 : f32
    %76 = vector.broadcast %61 : f32 to vector<1x128xf32>
    %77 = vector.broadcast %cst_29 : f32 to vector<1x128xf32>
    %78 = arith.select %75, %76, %77 : vector<1x128xi1>, vector<1x128xf32>
    %79 = arith.addf %73, %78 : vector<1x128xf32>
    %c0_30 = arith.constant 0 : index
    %c0_31 = arith.constant 0 : index
    %80 = vector.load %arg9[%c0_30, %c0_31] : memref<1x128xf32, #tpu.memory_space<vmem>>, vector<1x128xf32>
    tpu.vector_store %arg9[%c0_30, %c0_31], %79 {strides = array<i32>} : memref<1x128xf32, #tpu.memory_space<vmem>>, vector<1x128xf32>,
    return
  }
  func.func @transform_0(%arg0: i32) -> (i32, i32) {
    %c0_i32 = arith.constant 0 : i32
    %c0_i32_0 = arith.constant 0 : i32
    %c0_i32_1 = arith.constant 0 : i32
    return %c0_i32, %c0_i32_0 : i32, i32
  }
  func.func @transform_1(%arg0: i32) -> (i32, i32) {
    %c0_i32 = arith.constant 0 : i32
    %c0_i32_0 = arith.constant 0 : i32
    %c0_i32_1 = arith.constant 0 : i32
    return %c0_i32, %c0_i32_0 : i32, i32
  }
  func.func @transform_2(%arg0: i32) -> (i32, i32) {
    %c0_i32 = arith.constant 0 : i32
    %c0_i32_0 = arith.constant 0 : i32
    %c0_i32_1 = arith.constant 0 : i32
    return %c0_i32, %c0_i32_0 : i32, i32
  }
  func.func @transform_3(%arg0: i32) -> (i32, i32) {
    %c0_i32 = arith.constant 0 : i32
    %c0_i32_0 = arith.constant 0 : i32
    %c0_i32_1 = arith.constant 0 : i32
    return %c0_i32, %c0_i32_0 : i32, i32
  }
  func.func @transform_4(%arg0: i32) -> (i32, i32) {
    %c0_i32 = arith.constant 0 : i32
    %c0_i32_0 = arith.constant 0 : i32
    %c0_i32_1 = arith.constant 0 : i32
    return %c0_i32, %c0_i32_0 : i32, i32
  }
  func.func @transform_5(%arg0: i32) -> (i32, i32) {
    %c0_i32 = arith.constant 0 : i32
    %c0_i32_0 = arith.constant 0 : i32
    %c0_i32_1 = arith.constant 0 : i32
    return %c0_i32, %c0_i32_0 : i32, i32
  }
  func.func @transform_6(%arg0: i32) -> (i32, i32) {
    %c0_i32 = arith.constant 0 : i32
    %c0_i32_0 = arith.constant 0 : i32
    %c0_i32_1 = arith.constant 0 : i32
    return %c0_i32, %c0_i32_0 : i32, i32
  }
  func.func @transform_7(%arg0: i32) -> (i32, i32) {
    %c0_i32 = arith.constant 0 : i32
    %c0_i32_0 = arith.constant 0 : i32
    %c0_i32_1 = arith.constant 0 : i32
    return %c0_i32, %c0_i32_0 : i32, i32
  }
  func.func @transform_8(%arg0: i32) -> (i32, i32) {
    %c0_i32 = arith.constant 0 : i32
    %c0_i32_0 = arith.constant 0 : i32
    %c0_i32_1 = arith.constant 0 : i32
    return %c0_i32, %c0_i32_0 : i32, i32
  }
}

</mosaic_0001>

<llo_original>
// kernel: tpu_custom_call.1
$region0: #{tpu_custom_call.1}
  #allocation0 [shape = 'u32[]', space=smem, size = 0x4, offset = 0x4, fixed_abs, tag = 'smem constant byte address 0x4 - core index']
  #allocation1 [shape = 'u32[144,128]{1,0:T(1,128)}', space=vmem, size = 0x12000, scoped, tag = 'internal scratch']
  %s0 = inlined_call_operand.vmem [shape: f32[16,128], index: 0, kind: input, shape index: {}]
  %s1 = inlined_call_operand.vmem [shape: f32[16,128], index: 1, kind: input, shape index: {}]
  %s2 = inlined_call_operand.hbm [shape: f32[128,128], index: 2, kind: input, shape index: {}]
  %s3 = inlined_call_operand.vmem [shape: f32[16,128], index: 3, kind: input, shape index: {}]
  %s4 = inlined_call_operand.vmem [shape: s32[16,1], index: 4, kind: input, shape index: {}]
  %s5 = inlined_call_operand.vmem [shape: f32[16,1], index: 5, kind: input, shape index: {}]
  %s6 = inlined_call_operand.vmem [shape: f32[1,128], index: 6, kind: input, shape index: {}]
  %s7 = inlined_call_operand.vmem [shape: f32[16,1], index: 7, kind: input, shape index: {}]
  %s8 = inlined_call_operand.hbm [shape: f32[1,128], index: 8, kind: output, shape index: {}]
  %s9 = sld [smem:[#allocation0]]
  $region46: #{tpu_custom_call.1} parent=0
    _
  %s11 = ssub.s32 1, %s9
  %s12 = scalar_select 0, %s11, %s9
  $region1: #{tpu_custom_call.1} parent=0
    #allocation2 [shape = 'u8[65536]{0}', space=vmem, size = 0x10000, scoped, tag = 'input window, operand 2, single buffered']
    #allocation3 [shape = 's32[1]{0}', space=sflag, size = 0x4, scoped, tag = 'scoped memory for tpu_custom_call.1']
    #allocation4 [shape = 's32[1]{0}', space=sflag, size = 0x4, scoped, tag = 'scoped memory for tpu_custom_call.1']
    #allocation5 [shape = 'u8[512]{0}', space=vmem, size = 0x400, scoped, tag = 'output window, operand 0, single buffered']
    %13 = vsyncpa [#allocation3], 0
    %14 = vsyncpa [#allocation4], 0
    // Predicated region
    $region2: #{tpu_custom_call.1} parent=1 // pred_check
      _
    $region3: #{tpu_custom_call.1} parent=1 // pred_check_branch
      %16 = sbr.rel (0) target = $region5
    $region4: #{tpu_custom_call.1} parent=1 // pred_region
      _
    $region5: #{tpu_custom_call.1} parent=1 // pred_fallthru
      _
    // Predicated region
    $region6: #{tpu_custom_call.1} parent=1 // pred_check
      _
    $region7: #{tpu_custom_call.1} parent=1 // pred_check_branch
      %18 = sbr.rel (0) target = $region9
    $region8: #{tpu_custom_call.1} parent=1 // pred_region
      _
    $region9: #{tpu_custom_call.1} parent=1 // pred_fallthru
      _
    // Predicated region
    $region10: #{tpu_custom_call.1} parent=1 // pred_check
      _
    $region11: #{tpu_custom_call.1} parent=1 // pred_check_branch
      %20 = sbr.rel (0) target = $region13
    $region12: #{tpu_custom_call.1} parent=1 // pred_region
      %s22 = ssub.s32 2048, 2048
      %23 = vsyncadd [#allocation3], %s22
      %s24 = sshll.u32 [#allocation2], 4
      %s25 = int_to_ptr.vmem [resolvable:$true] %s24
      %30 = dma.hbm_to_vmem [thread:$0]  %s2, 2048, %s25, [#allocation3], 128, 128, 8
    $region13: #{tpu_custom_call.1} parent=1 // pred_fallthru
      _
    // Predicated region
    $region14: #{tpu_custom_call.1} parent=1 // pred_check
      _
    $region15: #{tpu_custom_call.1} parent=1 // pred_check_branch
      %32 = sbr.rel (0) target = $region17
    $region16: #{tpu_custom_call.1} parent=1 // pred_region
      _
    $region17: #{tpu_custom_call.1} parent=1 // pred_fallthru
      _
    // Predicated region
    $region18: #{tpu_custom_call.1} parent=1 // pred_check
      _
    $region19: #{tpu_custom_call.1} parent=1 // pred_check_branch
      %34 = sbr.rel (0) target = $region21
    $region20: #{tpu_custom_call.1} parent=1 // pred_region
      _
    $region21: #{tpu_custom_call.1} parent=1 // pred_fallthru
      _
    // Predicated region
    $region22: #{tpu_custom_call.1} parent=1 // pred_check
      _
    $region23: #{tpu_custom_call.1} parent=1 // pred_check_branch
      %36 = sbr.rel (0) target = $region25
    $region24: #{tpu_custom_call.1} parent=1 // pred_region
      _
    $region25: #{tpu_custom_call.1} parent=1 // pred_fallthru
      _
    // Predicated region
    $region26: #{tpu_custom_call.1} parent=1 // pred_check
      _
    $region27: #{tpu_custom_call.1} parent=1 // pred_check_branch
      %38 = sbr.rel (0) target = $region29
    $region28: #{tpu_custom_call.1} parent=1 // pred_region
      _
    $region29: #{tpu_custom_call.1} parent=1 // pred_fallthru
      _
    // Predicated region
    $region30: #{tpu_custom_call.1} parent=1 // pred_check
      _
    $region31: #{tpu_custom_call.1} parent=1 // pred_check_branch
      %40 = sbr.rel (0) target = $region33
    $region32: #{tpu_custom_call.1} parent=1 // pred_region
      _
    $region33: #{tpu_custom_call.1} parent=1 // pred_fallthru
      _
    // Predicated region
    $region34: #{tpu_custom_call.1} parent=1 // pred_check
      _
    $region35: #{tpu_custom_call.1} parent=1 // pred_check_branch
      %42 = sbr.rel (0) target = $region37
    $region36: #{tpu_custom_call.1} parent=1 // pred_region
      %43 = dma.done [#allocation3], 2048
    $region37: #{tpu_custom_call.1} parent=1 // pred_fallthru
      _
    %v44 = vld [vmem:[%s0] sm:$0xff]
    %v45 = vld [vmem:[%s0 + $0x8] sm:$0xff]
    %v46 = vmul.f32 %v44, %v44
    %v47 = vmul.f32 %v45, %v45
    %48 = vadd.xlane.f32.xlu0 %v46
    %v49 = vpop.xlane.xlu0 %48
    %50 = vadd.xlane.f32.xlu0 %v47
    %v51 = vpop.xlane.xlu0 %50
    %v52 = vmax.f32 %v49, 1e-24
    %v53 = vmax.f32 %v51, 1e-24
    %v54 = vrsqrt.pop %v52
    %v55 = vrsqrt.pop %v53
    %v56 = vmul.f32 %v44, %v54
    %v57 = vmul.f32 %v45, %v55
    %v58 = vld [vmem:[#allocation2] sm:$0xff]
    %v59 = vld [vmem:[#allocation2 + $0x8] sm:$0xff]
    %v60 = vld [vmem:[#allocation2 + $0x10] sm:$0xff]
    %v61 = vld [vmem:[#allocation2 + $0x18] sm:$0xff]
    %v62 = vld [vmem:[#allocation2 + $0x20] sm:$0xff]
    %v63 = vld [vmem:[#allocation2 + $0x28] sm:$0xff]
    %v64 = vld [vmem:[#allocation2 + $0x30] sm:$0xff]
    %v65 = vld [vmem:[#allocation2 + $0x38] sm:$0xff]
    %v66 = vld [vmem:[#allocation2 + $0x40] sm:$0xff]
    %v67 = vld [vmem:[#allocation2 + $0x48] sm:$0xff]
    %v68 = vld [vmem:[#allocation2 + $0x50] sm:$0xff]
    %v69 = vld [vmem:[#allocation2 + $0x58] sm:$0xff]
    %v70 = vld [vmem:[#allocation2 + $0x60] sm:$0xff]
    %v71 = vld [vmem:[#allocation2 + $0x68] sm:$0xff]
    %v72 = vld [vmem:[#allocation2 + $0x70] sm:$0xff]
    %v73 = vld [vmem:[#allocation2 + $0x78] sm:$0xff]
    %74 = vmatprep.subr.mxu0 0.0
    %75 = vmatpush1.msra.mxu0 %v58
    %76 = vmatprep.subr.mxu0 0.0
    %77 = vmatpush1.msra.mxu0 %v59
    %78 = vmatprep.subr.mxu0 0.0
    %79 = vmatpush1.msra.mxu0 %v60
    %80 = vmatprep.subr.mxu0 0.0
    %81 = vmatpush1.msra.mxu0 %v61
    %82 = vmatprep.subr.mxu0 0.0
    %83 = vmatpush1.msra.mxu0 %v62
    %84 = vmatprep.subr.mxu0 0.0
    %85 = vmatpush1.msra.mxu0 %v63
    %86 = vmatprep.subr.mxu0 0.0
    %87 = vmatpush1.msra.mxu0 %v64
    %88 = vmatprep.subr.mxu0 0.0
    %89 = vmatpush1.msra.mxu0 %v65
    %90 = vmatprep.subr.mxu0 0.0
    %91 = vmatpush1.msra.mxu0 %v66
    %92 = vmatprep.subr.mxu0 0.0
    %93 = vmatpush1.msra.mxu0 %v67
    %94 = vmatprep.subr.mxu0 0.0
    %95 = vmatpush1.msra.mxu0 %v68
    %96 = vmatprep.subr.mxu0 0.0
    %97 = vmatpush1.msra.mxu0 %v69
    %98 = vmatprep.subr.mxu0 0.0
    %99 = vmatpush1.msra.mxu0 %v70
    %100 = vmatprep.subr.mxu0 0.0
    %101 = vmatpush1.msra.mxu0 %v71
    %102 = vmatprep.subr.mxu0 0.0
    %103 = vmatpush1.msra.mxu0 %v72
    %104 = vmatprep.subr.mxu0 0.0
    %105 = vmatpush1.msra.mxu0 %v73
    %106 = vmatprep.subr.mxu0 0.0
    %107 = vmatpush1.msra.mxu0 0.0
    %108 = vmatprep.subr.mxu0 0.0
    %109 = vmatpush1.msra.mxu0 0.0
    %110 = vmatprep.subr.mxu0 0.0
    %111 = vmatpush1.msra.mxu0 0.0
    %112 = vmatprep.subr.mxu0 0.0
    %113 = vmatpush1.msra.mxu0 0.0
    %114 = vmatprep.subr.mxu0 0.0
    %115 = vmatpush1.msra.mxu0 0.0
    %116 = vmatprep.subr.mxu0 0.0
    %117 = vmatpush1.msra.mxu0 0.0
    %118 = vmatprep.subr.mxu0 0.0
    %119 = vmatpush1.msra.mxu0 0.0
    %120 = vmatprep.subr.mxu0 0.0
    %121 = vmatpush1.msra.mxu0 0.0
    %122 = vmatprep.subr.mxu0 0.0
    %123 = vmatpush1.msra.mxu0 0.0
    %124 = vmatprep.subr.mxu0 0.0
    %125 = vmatpush1.msra.mxu0 0.0
    %126 = vmatprep.subr.mxu0 0.0
    %127 = vmatpush1.msra.mxu0 0.0
    %128 = vmatprep.subr.mxu0 0.0
    %129 = vmatpush1.msra.mxu0 0.0
    %130 = vmatprep.subr.mxu0 0.0
    %131 = vmatpush1.msra.mxu0 0.0
    %132 = vmatprep.subr.mxu0 0.0
    %133 = vmatpush1.msra.mxu0 0.0
    %134 = vmatprep.subr.mxu0 0.0
    %135 = vmatpush1.msra.mxu0 0.0
    %136 = vmatprep.subr.mxu0 0.0
    %137 = vmatpush1.msra.mxu0 0.0
    %138 = vmatprep.mubr.f32.mxu0 0.0
    %139 = vmatmul.mubr.f32.gmra.mrb[0].mxu0 %v56
    %v140 = vpop.f32.mrb[0].mxu0
    %v141 = vadd.f32 0.0, %v140
    %v142 = vpop.f32.mrb[0].mxu0
    %143 = vmatprep.mubr.f32.mxu0 0.0
    %144 = vmatmul.mubr.f32.gmra.mrb[0].mxu0 %v57
    %v145 = vpop.f32.mrb[0].mxu0
    %v146 = vadd.f32 0.0, %v145
    %v147 = vpop.f32.mrb[0].mxu0
    %148 = vdwg.mxu0
    %v149 = vmul.f32 %v141, 14.285714
    %v150 = vmul.f32 %v146, 14.285714
    %v151 = vld [vmem:[%s3] sm:$0xff]
    %v152 = vld [vmem:[%s3 + $0x8] sm:$0xff]
    %v153 = vsub.f32 %v149, %v151
    %v154 = vsub.f32 %v150, %v152
    %155 = vmax.xlane.f32.xlu0 %v153
    %v156 = vpop.xlane.xlu0 %155
    %157 = vmax.xlane.f32.xlu0 %v154
    %v158 = vpop.xlane.xlu0 %157
    %v159 = vsub.f32 %v153, %v156
    %v160 = vsub.f32 %v154, %v158
    %v161 = vmul.f32 %v159, 1.442695
    %v162 = vpow.pop %v161
    %v163 = vmul.f32 %v160, 1.442695
    %v164 = vpow.pop %v163
    %165 = vadd.xlane.f32.xlu0 %v162
    %v166 = vpop.xlane.xlu0 %165
    %167 = vadd.xlane.f32.xlu0 %v164
    %v168 = vpop.xlane.xlu0 %167
    %v169 = vlog2.pop %v166
    %v170 = vmul.f32 %v169, 0.6931472
    %v171 = vlog2.pop %v168
    %v172 = vmul.f32 %v171, 0.6931472
    %v173 = vadd.f32 %v170, %v156
    %v174 = vadd.f32 %v172, %v158
    %v175 = vlaneseq
    %v176 = vand.u32 %v175, 127
    %v177 = vld [vmem:[%s4] sm:$0xff]
    %v178 = vld [vmem:[%s4 + $0x8] sm:$0xff]
    %179 = vset.pattern.permute.xlu0 0
    %180 = vperm.xlu0 %179, %v177
    %v181 = vpop.permute.xlu0 %180
    %182 = vset.pattern.permute.xlu0 0
    %183 = vperm.xlu0 %182, %v178
    %v184 = vpop.permute.xlu0 %183
    %vm185 = vcmp.eq.s32.totalorder %v176, %v181
    %vm186 = vcmp.eq.s32.totalorder %v176, %v184
    %v187 = vsel %vm185, %v153, 0.0
    %v188 = vsel %vm186, %v154, 0.0
    %189 = vadd.xlane.f32.xlu0 %v187
    %v190 = vpop.xlane.xlu0 %189
    %191 = vadd.xlane.f32.xlu0 %v188
    %v192 = vpop.xlane.xlu0 %191
    %v193 = vsub.f32 %v173, %v190
    %v194 = vsub.f32 %v174, %v192
    %v195 = vld [vmem:[%s5] sm:$0xff]
    %v196 = vld [vmem:[%s5 + $0x8] sm:$0xff]
    %v197 = vmul.f32 %v193, %v195
    %v198 = vmul.f32 %v194, %v196
    %vm199 = vcmask 7168
    %v200 = vsel %vm199, %v197, 0.0
    %v201 = vsel %vm199, %v198, 0.0
    %v202 = vadd.f32 %v200, %v201
    %203 = vadd.xlane.f32.xlu0 %v202
    %v204 = vpop.xlane.xlu0 %203
    %v205 = vrot.slane %v204, 4
    %v206 = vadd.f32 %v204, %v205
    %v207 = vrot.slane %v206, 2
    %v208 = vadd.f32 %v206, %v207
    %v209 = vrot.slane %v208, 1
    %v210 = vadd.f32 %v208, %v209
    %s211 = vtos %v210
    %v212 = vsel %vm199, %v195, 0.0
    %v213 = vsel %vm199, %v196, 0.0
    %v214 = vadd.f32 %v212, %v213
    %215 = vadd.xlane.f32.xlu0 %v214
    %v216 = vpop.xlane.xlu0 %215
    %v217 = vrot.slane %v216, 4
    %v218 = vadd.f32 %v216, %v217
    %v219 = vrot.slane %v218, 2
    %v220 = vadd.f32 %v218, %v219
    %v221 = vrot.slane %v220, 1
    %v222 = vadd.f32 %v220, %v221
    %s223 = vtos %v222
    %v224 = vld [vmem:[%s1] sm:$0xff]
    %v225 = vld [vmem:[%s1 + $0x8] sm:$0xff]
    %v226 = vmul.f32 %v224, %v224
    %v227 = vmul.f32 %v225, %v225
    %228 = vadd.xlane.f32.xlu0 %v226
    %v229 = vpop.xlane.xlu0 %228
    %230 = vadd.xlane.f32.xlu0 %v227
    %v231 = vpop.xlane.xlu0 %230
    %v232 = vmax.f32 %v229, 1e-24
    %v233 = vmax.f32 %v231, 1e-24
    %v234 = vrsqrt.pop %v232
    %v235 = vrsqrt.pop %v233
    %v236 = vmul.f32 %v224, %v234
    %v237 = vmul.f32 %v225, %v235
    %v238 = vld [vmem:[%s6] sm:$0x1]
    %v240 = vlaneseq
    %v241 = vshrl.u32 %v240, 7
    %v242 = vsub.s32 0, %v241
    %v243 = vrot.slane %v238, %v242
    %v245 = vmul.f32 %v236, %v243
    %v246 = vmul.f32 %v237, %v243
    %v247 = vld [vmem:[%s7] sm:$0xff]
    %v248 = vld [vmem:[%s7 + $0x8] sm:$0xff]
    %250 = vset.pattern.permute.xlu0 0
    %251 = vperm.xlu0 %250, %v247
    %v252 = vpop.permute.xlu0 %251
    %255 = vset.pattern.permute.xlu0 0
    %256 = vperm.xlu0 %255, %v248
    %v257 = vpop.permute.xlu0 %256
    %v259 = vmul.f32 %v245, %v252
    %v260 = vmul.f32 %v246, %v257
    %v261 = vadd.f32 %v259, %v260
    %262 = vadd.xlane.f32.xlu0 %v261
    %v263 = vpop.xlane.xlu0 %262
    %v264 = vrot.slane %v263, 4
    %v265 = vadd.f32 %v263, %v264
    %v266 = vrot.slane %v265, 2
    %v267 = vadd.f32 %v265, %v266
    %v268 = vrot.slane %v267, 1
    %v269 = vadd.f32 %v267, %v268
    %s270 = vtos %v269
    %vm271 = vcmp.eq.s32.totalorder %v176, 0
    %v272 = vstv %s211
    %v273 = vsel %vm271, %v272, 0.0
    %vm274 = vcmp.eq.s32.totalorder %v176, 1
    %v275 = vstv %s223
    %v276 = vsel %vm274, %v275, 0.0
    %v277 = vadd.f32 %v273, %v276
    %vm278 = vcmp.eq.s32.totalorder %v176, 2
    %v279 = vstv %s270
    %v280 = vsel %vm278, %v279, 0.0
    %v281 = vadd.f32 %v277, %v280
    %282 = vst [vmem:[#allocation5] sm:$0x1] %v281
    // Predicated region
    $region38: #{tpu_custom_call.1} parent=1 // pred_check
      _
    $region39: #{tpu_custom_call.1} parent=1 // pred_check_branch
      %284 = sbr.rel (0) target = $region41
    $region40: #{tpu_custom_call.1} parent=1 // pred_region
      %s286 = ssub.s32 16, 16
      %287 = vsyncadd [#allocation4], %s286
      %s289 = sshll.u32 [#allocation5], 4
      %s290 = int_to_ptr.vmem [resolvable:$true] %s289
      %292 = dma.vmem_to_hbm [thread:$0]  %s290, 16, %s8, [#allocation4]
    $region41: #{tpu_custom_call.1} parent=1 // pred_fallthru
      _
    // Predicated region
    $region42: #{tpu_custom_call.1} parent=1 // pred_check
      _
    $region43: #{tpu_custom_call.1} parent=1 // pred_check_branch
      %294 = sbr.rel (0) target = $region45
    $region44: #{tpu_custom_call.1} parent=1 // pred_region
      %295 = dma.done [#allocation4], 16
    $region45: #{tpu_custom_call.1} parent=1 // pred_fallthru
      _
    %296 = vsyncpa [#allocation3], 1
    %297 = vsyncpa [#allocation4], 1

</llo_original>
